<compile_context>
chip_gen: v5e
topology: v5e:2x2
jax: 0.10.0
libtpu: 0.0.40
codegen_flags: <defaults>
</compile_context>

<pallas_src>
import jax
import jax.numpy as jnp
from jax.experimental import pallas as pl
from jax.experimental.pallas import tpu as pltpu


def _round_up(x, m):
    return (x + m - 1) // m * m


def _mlp_kernel(x_ref,
                w1_ref, b1_ref,
                w2_ref, b2_ref,
                w3_ref, b3_ref,
                w4_ref, b4_ref,
                out_ref):
    # All math in f32 (matches torch nn.Linear); matmuls accumulate in f32 on
    # the MXU, bias add / ReLU on the VPU.
    x = x_ref[...]                                                   # (tb, n_in) f32

    # Layer 1: Linear + ReLU
    h = jnp.dot(x, w1_ref[...], preferred_element_type=jnp.float32) + b1_ref[...]
    h = jnp.maximum(h, 0.0)

    # Layer 2: Linear + ReLU
    h = jnp.dot(h, w2_ref[...], preferred_element_type=jnp.float32) + b2_ref[...]
    h = jnp.maximum(h, 0.0)

    # Layer 3: Linear (Dropout(p=0.2) == identity in eval mode)
    h = jnp.dot(h, w3_ref[...], preferred_element_type=jnp.float32) + b3_ref[...]

    # Layer 4: output head, written at the exact (tb, n_out) shape.
    out_ref[...] = (jnp.dot(h, w4_ref[...], preferred_element_type=jnp.float32)
                    + b4_ref[...]).astype(out_ref.dtype)


def pad_params_for_tpu(params):
    """Zero-pad the hidden dimension to a multiple of 128 lanes (done once,
    outside the hot path). Padding is numerically inert."""
    H = params["w2"].shape[0]
    H_pad = _round_up(H, 128)
    if H_pad == H:
        return dict(params)
    ph = H_pad - H
    return {
        "w1": jnp.pad(params["w1"], ((0, 0), (0, ph))),
        "b1": jnp.pad(params["b1"], ((0, 0), (0, ph))),
        "w2": jnp.pad(params["w2"], ((0, ph), (0, ph))),
        "b2": jnp.pad(params["b2"], ((0, 0), (0, ph))),
        "w3": jnp.pad(params["w3"], ((0, ph), (0, ph))),
        "b3": jnp.pad(params["b3"], ((0, 0), (0, ph))),
        "w4": jnp.pad(params["w4"], ((0, ph), (0, 0))),
        "b4": params["b4"],
    }


def neural_network_forward(x, params, *, tile_b=2048):
    """x: (B, number_inputs) f32.  params: hidden-padded f32 weights stored
    (in, out) and biases (1, out) — see pad_params_for_tpu."""
    B, n_in = x.shape
    H_pad = params["w2"].shape[0]
    n_out = params["b4"].shape[1]

    # Batch tile: multiple of 8 sublanes; ensure >=2 grid steps whenever B
    # allows it so both v7x TensorCores get work (and the x/out streams get
    # real double-buffer overlap), while keeping tiles big on v5e/v6e.
    tile_b = min(tile_b, _round_up(pl.cdiv(B, 2), 8))
    tile_b = _round_up(max(tile_b, 8), 8)
    grid = (pl.cdiv(B, tile_b),)

    itemsize = x.dtype.itemsize
    weights = (params["w1"], params["b1"], params["w2"], params["b2"],
               params["w3"], params["b3"], params["w4"], params["b4"])

    in_specs = [
        pl.BlockSpec((tile_b, n_in), lambda i: (i, 0)),       # x: streams per batch tile
        pl.BlockSpec((n_in, H_pad),  lambda i: (0, 0)),       # w1: VMEM-resident
        pl.BlockSpec((1, H_pad),     lambda i: (0, 0)),       # b1
        pl.BlockSpec((H_pad, H_pad), lambda i: (0, 0)),       # w2
        pl.BlockSpec((1, H_pad),     lambda i: (0, 0)),       # b2
        pl.BlockSpec((H_pad, H_pad), lambda i: (0, 0)),       # w3
        pl.BlockSpec((1, H_pad),     lambda i: (0, 0)),       # b3
        pl.BlockSpec((H_pad, n_out), lambda i: (0, 0)),       # w4
        pl.BlockSpec((1, n_out),     lambda i: (0, 0)),       # b4
    ]
    # Exact-shape output block: last dim == full n_out (legal; tiny masked
    # store beats moving 8x padded f32 bytes), partial last batch tile is
    # masked on writeback by Pallas.
    out_specs = pl.BlockSpec((tile_b, n_out), lambda i: (i, 0))

    # VMEM budget from actual block sizes: 2x for default double-buffering,
    # plus intermediate activations and headroom. Clamp to sane bounds.
    resident_bytes = sum(int(w.size) * w.dtype.itemsize for w in weights)
    stream_bytes = tile_b * (n_in * itemsize + n_out * 4)
    act_bytes = 4 * tile_b * H_pad * 4
    vmem_limit = min(100 * 1024 * 1024,
                     max(16 * 1024 * 1024,
                         2 * (2 * resident_bytes + 2 * stream_bytes + act_bytes)))

    flops = 2 * B * (n_in * H_pad + 2 * H_pad * H_pad + H_pad * n_out)
    bytes_accessed = B * n_in * itemsize + resident_bytes + B * n_out * 4

    return pl.pallas_call(
        _mlp_kernel,
        out_shape=jax.ShapeDtypeStruct((B, n_out), jnp.float32),
        grid=grid,
        in_specs=in_specs,
        out_specs=out_specs,
        compiler_params=pltpu.CompilerParams(
            dimension_semantics=("parallel",),
            vmem_limit_bytes=int(vmem_limit),
        ),
        cost_estimate=pl.CostEstimate(
            flops=flops, transcendentals=0, bytes_accessed=bytes_accessed),
    )(x, *weights)


def init_params(key, number_inputs, number_hidden, number_outputs):
    """Deterministic init mirroring nn.Linear (f32); weights stored (in, out)."""
    ks = jax.random.split(key, 8)

    def linear(kw, kb, fan_in, fan_out):
        # PyTorch nn.Linear default: U(-1/sqrt(fan_in), 1/sqrt(fan_in))
        bound = 1.0 / jnp.sqrt(jnp.float32(fan_in))
        w = jax.random.uniform(kw, (fan_in, fan_out), jnp.float32, -bound, bound)
        b = jax.random.uniform(kb, (1, fan_out), jnp.float32, -bound, bound)
        return w, b

    w1, b1 = linear(ks[0], ks[1], number_inputs, number_hidden)
    w2, b2 = linear(ks[2], ks[3], number_hidden, number_hidden)
    w3, b3 = linear(ks[4], ks[5], number_hidden, number_hidden)
    w4, b4 = linear(ks[6], ks[7], number_hidden, number_outputs)
    return {"w1": w1, "b1": b1, "w2": w2, "b2": b2,
            "w3": w3, "b3": b3, "w4": w4, "b4": b4}


def _reference(x, p):
    """Pure-JAX f32 reference (dropout == identity in eval mode)."""
    h = jnp.maximum(jnp.dot(x, p["w1"]) + p["b1"], 0.0)
    h = jnp.maximum(jnp.dot(h, p["w2"]) + p["b2"], 0.0)
    h = jnp.dot(h, p["w3"]) + p["b3"]
    return jnp.dot(h, p["w4"]) + p["b4"]


if __name__ == "__main__":
    number_inputs, number_hidden, number_outputs = 32, 64, 16
    batch = 200          # not a multiple of the tile -> exercises partial tiles
    tile_b = 128         # small tile so the test runs >1 grid step

    key = jax.random.PRNGKey(0)
    kx, kp = jax.random.split(key)
    x = jax.random.normal(kx, (batch, number_inputs), jnp.float32)
    params = init_params(kp, number_inputs, number_hidden, number_outputs)
    params_tpu = pad_params_for_tpu(params)   # one-time hidden-dim lane padding

    out = neural_network_forward(x, params_tpu, tile_b=tile_b)
    out = jax.block_until_ready(out)

    ref = _reference(x, params)
    assert out.shape == (batch, number_outputs)
    assert jnp.allclose(out, ref, atol=1e-2, rtol=1e-2)

    print("KERNEL_OK")
</pallas_src>

<mosaic_0001>
module attributes {stable_mosaic.version = 11 : i64} {
  func.func @_mlp_kernel(%arg0: i32, %arg1: memref<104x32xf32, #tpu.memory_space<vmem>>, %arg2: memref<32x128xf32, #tpu.memory_space<vmem>>, %arg3: memref<1x128xf32, #tpu.memory_space<vmem>>, %arg4: memref<128x128xf32, #tpu.memory_space<vmem>>, %arg5: memref<1x128xf32, #tpu.memory_space<vmem>>, %arg6: memref<128x128xf32, #tpu.memory_space<vmem>>, %arg7: memref<1x128xf32, #tpu.memory_space<vmem>>, %arg8: memref<128x16xf32, #tpu.memory_space<vmem>>, %arg9: memref<1x16xf32, #tpu.memory_space<vmem>>, %arg10: memref<104x16xf32, #tpu.memory_space<vmem>>) attributes {dimension_semantics = [#tpu.dimension_semantics<parallel>], iteration_bounds = array<i64: 2>, scalar_prefetch = 0 : i64, scratch_operands = 0 : i64, tpu.core_type = #tpu.core_type<tc>, window_params = [{transform_indices = @transform_0, window_bounds = array<i64: 104, 32>}, {pipeline_mode = #tpu.pipeline_mode<synchronous>, transform_indices = @transform_1, window_bounds = array<i64: 32, 128>}, {pipeline_mode = #tpu.pipeline_mode<synchronous>, transform_indices = @transform_2, window_bounds = array<i64: 1, 128>}, {pipeline_mode = #tpu.pipeline_mode<synchronous>, transform_indices = @transform_3, window_bounds = array<i64: 128, 128>}, {pipeline_mode = #tpu.pipeline_mode<synchronous>, transform_indices = @transform_4, window_bounds = array<i64: 1, 128>}, {pipeline_mode = #tpu.pipeline_mode<synchronous>, transform_indices = @transform_5, window_bounds = array<i64: 128, 128>}, {pipeline_mode = #tpu.pipeline_mode<synchronous>, transform_indices = @transform_6, window_bounds = array<i64: 1, 128>}, {pipeline_mode = #tpu.pipeline_mode<synchronous>, transform_indices = @transform_7, window_bounds = array<i64: 128, 16>}, {pipeline_mode = #tpu.pipeline_mode<synchronous>, transform_indices = @transform_8, window_bounds = array<i64: 1, 16>}, {transform_indices = @transform_9, window_bounds = array<i64: 104, 16>}]} {
    %c0 = arith.constant 0 : index
    %c0_0 = arith.constant 0 : index
    %0 = vector.load %arg1[%c0, %c0_0] : memref<104x32xf32, #tpu.memory_space<vmem>>, vector<104x32xf32>
    %c0_1 = arith.constant 0 : index
    %c0_2 = arith.constant 0 : index
    %1 = vector.load %arg2[%c0_1, %c0_2] : memref<32x128xf32, #tpu.memory_space<vmem>>, vector<32x128xf32>
    %cst = arith.constant dense<0.000000e+00> : vector<104x128xf32>
    %2 = tpu.matmul %0, %1, %cst {dimension_numbers = #tpu.dot_dimension_numbers<[1], [0], [0], [1], [0, 0, 1, 1], [], []>} : vector<104x32xf32>, vector<32x128xf32>, vector<104x128xf32> -> vector<104x128xf32>
    %c0_3 = arith.constant 0 : index
    %c0_4 = arith.constant 0 : index
    %3 = vector.load %arg3[%c0_3, %c0_4] : memref<1x128xf32, #tpu.memory_space<vmem>>, vector<1x128xf32>
    %4 = vector.broadcast %3 : vector<1x128xf32> to vector<104x128xf32>
    %5 = arith.addf %2, %4 : vector<104x128xf32>
    %cst_5 = arith.constant 0.000000e+00 : f32
    %6 = vector.broadcast %cst_5 : f32 to vector<104x128xf32>
    %7 = arith.maximumf %5, %6 : vector<104x128xf32>
    %c0_6 = arith.constant 0 : index
    %c0_7 = arith.constant 0 : index
    %8 = vector.load %arg4[%c0_6, %c0_7] : memref<128x128xf32, #tpu.memory_space<vmem>>, vector<128x128xf32>
    %cst_8 = arith.constant dense<0.000000e+00> : vector<104x128xf32>
    %9 = tpu.matmul %7, %8, %cst_8 {dimension_numbers = #tpu.dot_dimension_numbers<[1], [0], [0], [1], [0, 0, 1, 1], [], []>} : vector<104x128xf32>, vector<128x128xf32>, vector<104x128xf32> -> vector<104x128xf32>
    %c0_9 = arith.constant 0 : index
    %c0_10 = arith.constant 0 : index
    %10 = vector.load %arg5[%c0_9, %c0_10] : memref<1x128xf32, #tpu.memory_space<vmem>>, vector<1x128xf32>
    %11 = vector.broadcast %10 : vector<1x128xf32> to vector<104x128xf32>
    %12 = arith.addf %9, %11 : vector<104x128xf32>
    %cst_11 = arith.constant 0.000000e+00 : f32
    %13 = vector.broadcast %cst_11 : f32 to vector<104x128xf32>
    %14 = arith.maximumf %12, %13 : vector<104x128xf32>
    %c0_12 = arith.constant 0 : index
    %c0_13 = arith.constant 0 : index
    %15 = vector.load %arg6[%c0_12, %c0_13] : memref<128x128xf32, #tpu.memory_space<vmem>>, vector<128x128xf32>
    %cst_14 = arith.constant dense<0.000000e+00> : vector<104x128xf32>
    %16 = tpu.matmul %14, %15, %cst_14 {dimension_numbers = #tpu.dot_dimension_numbers<[1], [0], [0], [1], [0, 0, 1, 1], [], []>} : vector<104x128xf32>, vector<128x128xf32>, vector<104x128xf32> -> vector<104x128xf32>
    %c0_15 = arith.constant 0 : index
    %c0_16 = arith.constant 0 : index
    %17 = vector.load %arg7[%c0_15, %c0_16] : memref<1x128xf32, #tpu.memory_space<vmem>>, vector<1x128xf32>
    %18 = vector.broadcast %17 : vector<1x128xf32> to vector<104x128xf32>
    %19 = arith.addf %16, %18 : vector<104x128xf32>
    %c0_17 = arith.constant 0 : index
    %c0_18 = arith.constant 0 : index
    %20 = vector.load %arg8[%c0_17, %c0_18] : memref<128x16xf32, #tpu.memory_space<vmem>>, vector<128x16xf32>
    %cst_19 = arith.constant dense<0.000000e+00> : vector<104x16xf32>
    %21 = tpu.matmul %19, %20, %cst_19 {dimension_numbers = #tpu.dot_dimension_numbers<[1], [0], [0], [1], [0, 0, 1, 1], [], []>} : vector<104x128xf32>, vector<128x16xf32>, vector<104x16xf32> -> vector<104x16xf32>
    %c0_20 = arith.constant 0 : index
    %c0_21 = arith.constant 0 : index
    %22 = vector.load %arg9[%c0_20, %c0_21] : memref<1x16xf32, #tpu.memory_space<vmem>>, vector<1x16xf32>
    %23 = vector.broadcast %22 : vector<1x16xf32> to vector<104x16xf32>
    %24 = arith.addf %21, %23 : vector<104x16xf32>
    %c0_22 = arith.constant 0 : index
    %c0_23 = arith.constant 0 : index
    %25 = vector.load %arg10[%c0_22, %c0_23] : memref<104x16xf32, #tpu.memory_space<vmem>>, vector<104x16xf32>
    tpu.vector_store %arg10[%c0_22, %c0_23], %24 {strides = array<i32>} : memref<104x16xf32, #tpu.memory_space<vmem>>, vector<104x16xf32>,
    return
  }
  func.func @transform_0(%arg0: i32) -> (i32, i32) {
    %c0_i32 = arith.constant 0 : i32
    %c0_i32_0 = arith.constant 0 : i32
    return %arg0, %c0_i32 : i32, i32
  }
  func.func @transform_1(%arg0: i32) -> (i32, i32) {
    %c0_i32 = arith.constant 0 : i32
    %c0_i32_0 = arith.constant 0 : i32
    %c0_i32_1 = arith.constant 0 : i32
    return %c0_i32, %c0_i32_0 : i32, i32
  }
  func.func @transform_2(%arg0: i32) -> (i32, i32) {
    %c0_i32 = arith.constant 0 : i32
    %c0_i32_0 = arith.constant 0 : i32
    %c0_i32_1 = arith.constant 0 : i32
    return %c0_i32, %c0_i32_0 : i32, i32
  }
  func.func @transform_3(%arg0: i32) -> (i32, i32) {
    %c0_i32 = arith.constant 0 : i32
    %c0_i32_0 = arith.constant 0 : i32
    %c0_i32_1 = arith.constant 0 : i32
    return %c0_i32, %c0_i32_0 : i32, i32
  }
  func.func @transform_4(%arg0: i32) -> (i32, i32) {
    %c0_i32 = arith.constant 0 : i32
    %c0_i32_0 = arith.constant 0 : i32
    %c0_i32_1 = arith.constant 0 : i32
    return %c0_i32, %c0_i32_0 : i32, i32
  }
  func.func @transform_5(%arg0: i32) -> (i32, i32) {
    %c0_i32 = arith.constant 0 : i32
    %c0_i32_0 = arith.constant 0 : i32
    %c0_i32_1 = arith.constant 0 : i32
    return %c0_i32, %c0_i32_0 : i32, i32
  }
  func.func @transform_6(%arg0: i32) -> (i32, i32) {
    %c0_i32 = arith.constant 0 : i32
    %c0_i32_0 = arith.constant 0 : i32
    %c0_i32_1 = arith.constant 0 : i32
    return %c0_i32, %c0_i32_0 : i32, i32
  }
  func.func @transform_7(%arg0: i32) -> (i32, i32) {
    %c0_i32 = arith.constant 0 : i32
    %c0_i32_0 = arith.constant 0 : i32
    %c0_i32_1 = arith.constant 0 : i32
    return %c0_i32, %c0_i32_0 : i32, i32
  }
  func.func @transform_8(%arg0: i32) -> (i32, i32) {
    %c0_i32 = arith.constant 0 : i32
    %c0_i32_0 = arith.constant 0 : i32
    %c0_i32_1 = arith.constant 0 : i32
    return %c0_i32, %c0_i32_0 : i32, i32
  }
  func.func @transform_9(%arg0: i32) -> (i32, i32) {
    %c0_i32 = arith.constant 0 : i32
    %c0_i32_0 = arith.constant 0 : i32
    return %arg0, %c0_i32 : i32, i32
  }
}

</mosaic_0001>

<llo_original>
// kernel: tpu_custom_call.1
$region0: #{tpu_custom_call.1}
  #allocation0 [shape = 'u32[]', space=smem, size = 0x4, offset = 0x4, fixed_abs, tag = 'smem constant byte address 0x4 - core index']
  #allocation1 [shape = 'u32[72,128]{1,0:T(1,128)}', space=vmem, size = 0x9000, scoped, tag = 'internal scratch']
  %s0 = inlined_call_operand.vmem [shape: f32[200,32], index: 0, kind: input, shape index: {}]
  %s1 = inlined_call_operand.vmem [shape: f32[32,128], index: 1, kind: input, shape index: {}]
  %s2 = inlined_call_operand.vmem [shape: f32[1,128], index: 2, kind: input, shape index: {}]
  %s3 = inlined_call_operand.vmem [shape: f32[128,128], index: 3, kind: input, shape index: {}]
  %s4 = inlined_call_operand.vmem [shape: f32[1,128], index: 4, kind: input, shape index: {}]
  %s5 = inlined_call_operand.vmem [shape: f32[128,128], index: 5, kind: input, shape index: {}]
  %s6 = inlined_call_operand.vmem [shape: f32[1,128], index: 6, kind: input, shape index: {}]
  %s7 = inlined_call_operand.vmem [shape: f32[128,16], index: 7, kind: input, shape index: {}]
  %s8 = inlined_call_operand.vmem [shape: f32[1,16], index: 8, kind: input, shape index: {}]
  %s9 = inlined_call_operand.vmem [shape: f32[200,16], index: 9, kind: output, shape index: {}]
  %s10 = sld [smem:[#allocation0]]
  $region117: #{tpu_custom_call.1} parent=0
    _
  %s12 = ssub.s32 1, %s10
  %s13 = scalar_select 0, %s12, %s10
  $region1: #{tpu_custom_call.1} parent=0
    #allocation2 [shape = 'u8[106496]{0}', space=vmem, size = 0x1a000, scoped, tag = 'output window, operand 0']
    loop: start=0, step=1, limit=4
    $region2: #{tpu_custom_call.1} parent=1 // loop_pre_header
      _
    $region3: #{tpu_custom_call.1} parent=1 // loop_header
      %s15 = sphi 0, %s19
      %p16 = scmp.ge.s32.totalorder %s15, 4
      %s25 = sphi 0, %s27
      %s28 = sphi 0, %s25
      %s29 = sphi 0, %s28
      %s45 = sphi 0, %s29
      %s49 = sphi 0, %s49
      %s51 = sphi 0, %s49
      %s52 = sphi 0, %s51
      %s66 = sphi 0, %s52
      %s70 = sphi 0, %s70
      %s72 = sphi 0, %s70
      %s73 = sphi 0, %s72
      %s87 = sphi 0, %s73
      %s91 = sphi 0, %s91
      %s93 = sphi 0, %s91
      %s94 = sphi 0, %s93
      %s108 = sphi 0, %s94
      %s112 = sphi 0, %s112
      %s114 = sphi 0, %s112
      %s115 = sphi 0, %s114
      %s129 = sphi 0, %s115
      %s133 = sphi 0, %s133
      %s135 = sphi 0, %s133
      %s136 = sphi 0, %s135
      %s150 = sphi 0, %s136
      %s154 = sphi 0, %s154
      %s156 = sphi 0, %s154
      %s157 = sphi 0, %s156
      %s171 = sphi 0, %s157
      %s175 = sphi 0, %s175
      %s177 = sphi 0, %s175
      %s178 = sphi 0, %s177
      %s192 = sphi 0, %s178
      %s196 = sphi 0, %s196
      %s198 = sphi 0, %s196
      %s199 = sphi 0, %s198
      %s213 = sphi 0, %s199
      %s219 = sphi 0, %s221
      %s222 = sphi 0, %s219
      %s223 = sphi 0, %s222
      %s239 = sphi 0, %s223
    $region4: #{tpu_custom_call.1} parent=1 // loop_header_branch
      %18 = sbr.rel (%p16) target = $region8
    $region5: #{tpu_custom_call.1} parent=1 // loop_body
      %s20 = ssub.s32 %s15, 1
      %s21 = ssub.s32 %s15, 2
      %s22 = sadd.s32 %s15, 1
      %s23 = ssub.s32 %s15, %s22
      %p24 = scmp.eq.s32.totalorder %s23, 0
      %s26 = sadd.s32 %s25, 1
      %s27 = scalar_select %p24, %s25, %s26
      %p30 = pneg %p24
      %p31 = scmp.eq.s32.totalorder %s15, 1
      %p32 = por %p30, %p31
      %p33 = scmp.ne.s32.totalorder %s25, %s28
      %p34 = scmp.eq.s32.totalorder %s15, 0
      %p35 = por %p33, %p34
      %p36 = scmp.ne.s32.totalorder %s25, %s28
      %p37 = scmp.eq.s32.totalorder %s20, 1
      %p38 = por %p36, %p37
      %p39 = scmp.ne.s32.totalorder %s28, %s29
      %p40 = scmp.eq.s32.totalorder %s20, 0
      %p41 = por %p39, %p40
      %p42 = scmp.ne.s32.totalorder %s28, %s29
      %p43 = scmp.eq.s32.totalorder %s21, 1
      %p44 = por %p42, %p43
      %p46 = scmp.ne.s32.totalorder %s29, %s45
      %p47 = scmp.eq.s32.totalorder %s21, 0
      %p48 = por %p46, %p47
      %s50 = sadd.s32 %s49, 1
      %p53 = scmp.eq.s32.totalorder %s15, 1
      %p54 = scmp.ne.s32.totalorder %s49, %s51
      %p55 = scmp.eq.s32.totalorder %s15, 0
      %p56 = por %p54, %p55
      %p57 = scmp.ne.s32.totalorder %s49, %s51
      %p58 = scmp.eq.s32.totalorder %s20, 1
      %p59 = por %p57, %p58
      %p60 = scmp.ne.s32.totalorder %s51, %s52
      %p61 = scmp.eq.s32.totalorder %s20, 0
      %p62 = por %p60, %p61
      %p63 = scmp.ne.s32.totalorder %s51, %s52
      %p64 = scmp.eq.s32.totalorder %s21, 1
      %p65 = por %p63, %p64
      %p67 = scmp.ne.s32.totalorder %s52, %s66
      %p68 = scmp.eq.s32.totalorder %s21, 0
      %p69 = por %p67, %p68
      %s71 = sadd.s32 %s70, 1
      %p74 = scmp.eq.s32.totalorder %s15, 1
      %p75 = scmp.ne.s32.totalorder %s70, %s72
      %p76 = scmp.eq.s32.totalorder %s15, 0
      %p77 = por %p75, %p76
      %p78 = scmp.ne.s32.totalorder %s70, %s72
      %p79 = scmp.eq.s32.totalorder %s20, 1
      %p80 = por %p78, %p79
      %p81 = scmp.ne.s32.totalorder %s72, %s73
      %p82 = scmp.eq.s32.totalorder %s20, 0
      %p83 = por %p81, %p82
      %p84 = scmp.ne.s32.totalorder %s72, %s73
      %p85 = scmp.eq.s32.totalorder %s21, 1
      %p86 = por %p84, %p85
      %p88 = scmp.ne.s32.totalorder %s73, %s87
      %p89 = scmp.eq.s32.totalorder %s21, 0
      %p90 = por %p88, %p89
      %s92 = sadd.s32 %s91, 1
      %p95 = scmp.eq.s32.totalorder %s15, 1
      %p96 = scmp.ne.s32.totalorder %s91, %s93
      %p97 = scmp.eq.s32.totalorder %s15, 0
      %p98 = por %p96, %p97
      %p99 = scmp.ne.s32.totalorder %s91, %s93
      %p100 = scmp.eq.s32.totalorder %s20, 1
      %p101 = por %p99, %p100
      %p102 = scmp.ne.s32.totalorder %s93, %s94
      %p103 = scmp.eq.s32.totalorder %s20, 0
      %p104 = por %p102, %p103
      %p105 = scmp.ne.s32.totalorder %s93, %s94
      %p106 = scmp.eq.s32.totalorder %s21, 1
      %p107 = por %p105, %p106
      %p109 = scmp.ne.s32.totalorder %s94, %s108
      %p110 = scmp.eq.s32.totalorder %s21, 0
      %p111 = por %p109, %p110
      %s113 = sadd.s32 %s112, 1
      %p116 = scmp.eq.s32.totalorder %s15, 1
      %p117 = scmp.ne.s32.totalorder %s112, %s114
      %p118 = scmp.eq.s32.totalorder %s15, 0
      %p119 = por %p117, %p118
      %p120 = scmp.ne.s32.totalorder %s112, %s114
      %p121 = scmp.eq.s32.totalorder %s20, 1
      %p122 = por %p120, %p121
      %p123 = scmp.ne.s32.totalorder %s114, %s115
      %p124 = scmp.eq.s32.totalorder %s20, 0
      %p125 = por %p123, %p124
      %p126 = scmp.ne.s32.totalorder %s114, %s115
      %p127 = scmp.eq.s32.totalorder %s21, 1
      %p128 = por %p126, %p127
      %p130 = scmp.ne.s32.totalorder %s115, %s129
      %p131 = scmp.eq.s32.totalorder %s21, 0
      %p132 = por %p130, %p131
      %s134 = sadd.s32 %s133, 1
      %p137 = scmp.eq.s32.totalorder %s15, 1
      %p138 = scmp.ne.s32.totalorder %s133, %s135
      %p139 = scmp.eq.s32.totalorder %s15, 0
      %p140 = por %p138, %p139
      %p141 = scmp.ne.s32.totalorder %s133, %s135
      %p142 = scmp.eq.s32.totalorder %s20, 1
      %p143 = por %p141, %p142
      %p144 = scmp.ne.s32.totalorder %s135, %s136
      %p145 = scmp.eq.s32.totalorder %s20, 0
      %p146 = por %p144, %p145
      %p147 = scmp.ne.s32.totalorder %s135, %s136
      %p148 = scmp.eq.s32.totalorder %s21, 1
      %p149 = por %p147, %p148
      %p151 = scmp.ne.s32.totalorder %s136, %s150
      %p152 = scmp.eq.s32.totalorder %s21, 0
      %p153 = por %p151, %p152
      %s155 = sadd.s32 %s154, 1
      %p158 = scmp.eq.s32.totalorder %s15, 1
      %p159 = scmp.ne.s32.totalorder %s154, %s156
      %p160 = scmp.eq.s32.totalorder %s15, 0
      %p161 = por %p159, %p160
      %p162 = scmp.ne.s32.totalorder %s154, %s156
      %p163 = scmp.eq.s32.totalorder %s20, 1
      %p164 = por %p162, %p163
      %p165 = scmp.ne.s32.totalorder %s156, %s157
      %p166 = scmp.eq.s32.totalorder %s20, 0
      %p167 = por %p165, %p166
      %p168 = scmp.ne.s32.totalorder %s156, %s157
      %p169 = scmp.eq.s32.totalorder %s21, 1
      %p170 = por %p168, %p169
      %p172 = scmp.ne.s32.totalorder %s157, %s171
      %p173 = scmp.eq.s32.totalorder %s21, 0
      %p174 = por %p172, %p173
      %s176 = sadd.s32 %s175, 1
      %p179 = scmp.eq.s32.totalorder %s15, 1
      %p180 = scmp.ne.s32.totalorder %s175, %s177
      %p181 = scmp.eq.s32.totalorder %s15, 0
      %p182 = por %p180, %p181
      %p183 = scmp.ne.s32.totalorder %s175, %s177
      %p184 = scmp.eq.s32.totalorder %s20, 1
      %p185 = por %p183, %p184
      %p186 = scmp.ne.s32.totalorder %s177, %s178
      %p187 = scmp.eq.s32.totalorder %s20, 0
      %p188 = por %p186, %p187
      %p189 = scmp.ne.s32.totalorder %s177, %s178
      %p190 = scmp.eq.s32.totalorder %s21, 1
      %p191 = por %p189, %p190
      %p193 = scmp.ne.s32.totalorder %s178, %s192
      %p194 = scmp.eq.s32.totalorder %s21, 0
      %p195 = por %p193, %p194
      %s197 = sadd.s32 %s196, 1
      %p200 = scmp.eq.s32.totalorder %s15, 1
      %p201 = scmp.ne.s32.totalorder %s196, %s198
      %p202 = scmp.eq.s32.totalorder %s15, 0
      %p203 = por %p201, %p202
      %p204 = scmp.ne.s32.totalorder %s196, %s198
      %p205 = scmp.eq.s32.totalorder %s20, 1
      %p206 = por %p204, %p205
      %p207 = scmp.ne.s32.totalorder %s198, %s199
      %p208 = scmp.eq.s32.totalorder %s20, 0
      %p209 = por %p207, %p208
      %p210 = scmp.ne.s32.totalorder %s198, %s199
      %p211 = scmp.eq.s32.totalorder %s21, 1
      %p212 = por %p210, %p211
      %p214 = scmp.ne.s32.totalorder %s199, %s213
      %p215 = scmp.eq.s32.totalorder %s21, 0
      %p216 = por %p214, %p215
      %s217 = ssub.s32 %s15, %s22
      %p218 = scmp.eq.s32.totalorder %s217, 0
      %s220 = sadd.s32 %s219, 1
      %s221 = scalar_select %p218, %s219, %s220
      %p224 = pneg %p218
      %p225 = scmp.eq.s32.totalorder %s15, 1
      %p226 = por %p224, %p225
      %p227 = scmp.ne.s32.totalorder %s219, %s222
      %p228 = scmp.eq.s32.totalorder %s15, 0
      %p229 = por %p227, %p228
      %p230 = scmp.ne.s32.totalorder %s219, %s222
      %p231 = scmp.eq.s32.totalorder %s20, 1
      %p232 = por %p230, %p231
      %p233 = scmp.ne.s32.totalorder %s222, %s223
      %p234 = scmp.eq.s32.totalorder %s20, 0
      %p235 = por %p233, %p234
      %p236 = scmp.ne.s32.totalorder %s222, %s223
      %p237 = scmp.eq.s32.totalorder %s21, 1
      %p238 = por %p236, %p237
      %p240 = scmp.ne.s32.totalorder %s223, %s239
      %p241 = scmp.eq.s32.totalorder %s21, 0
      %p242 = por %p240, %p241
      %p243 = scmp.le.s32.totalorder 1, %s15
      %p244 = scmp.lt.s32.totalorder %s15, 3
      %p245 = pnand %p243, %p244
      %p246 = pneg %p245
      // Predicated region
      $region9: #{tpu_custom_call.1} parent=5 // pred_check
        _
      $region10: #{tpu_custom_call.1} parent=5 // pred_check_branch
        %248 = sbr.rel (%p245) target = $region12
      $region11: #{tpu_custom_call.1} parent=5 // pred_region
        %s249 = ssub.s32 %s15, 1
        // Predicated region
        $region13: #{tpu_custom_call.1} parent=11 // pred_check
          %p250 = pneg %p62
        $region14: #{tpu_custom_call.1} parent=11 // pred_check_branch
          %252 = sbr.rel (%p250) target = $region16
        $region15: #{tpu_custom_call.1} parent=11 // pred_region
          _
        $region16: #{tpu_custom_call.1} parent=11 // pred_fallthru
          _
        // Predicated region
        $region17: #{tpu_custom_call.1} parent=11 // pred_check
          %p253 = pneg %p83
        $region18: #{tpu_custom_call.1} parent=11 // pred_check_branch
          %255 = sbr.rel (%p253) target = $region20
        $region19: #{tpu_custom_call.1} parent=11 // pred_region
          _
        $region20: #{tpu_custom_call.1} parent=11 // pred_fallthru
          _
        // Predicated region
        $region21: #{tpu_custom_call.1} parent=11 // pred_check
          %p256 = pneg %p104
        $region22: #{tpu_custom_call.1} parent=11 // pred_check_branch
          %258 = sbr.rel (%p256) target = $region24
        $region23: #{tpu_custom_call.1} parent=11 // pred_region
          _
        $region24: #{tpu_custom_call.1} parent=11 // pred_fallthru
          _
        // Predicated region
        $region25: #{tpu_custom_call.1} parent=11 // pred_check
          %p259 = pneg %p125
        $region26: #{tpu_custom_call.1} parent=11 // pred_check_branch
          %261 = sbr.rel (%p259) target = $region28
        $region27: #{tpu_custom_call.1} parent=11 // pred_region
          _
        $region28: #{tpu_custom_call.1} parent=11 // pred_fallthru
          _
        // Predicated region
        $region29: #{tpu_custom_call.1} parent=11 // pred_check
          %p262 = pneg %p146
        $region30: #{tpu_custom_call.1} parent=11 // pred_check_branch
          %264 = sbr.rel (%p262) target = $region32
        $region31: #{tpu_custom_call.1} parent=11 // pred_region
          _
        $region32: #{tpu_custom_call.1} parent=11 // pred_fallthru
          _
        // Predicated region
        $region33: #{tpu_custom_call.1} parent=11 // pred_check
          %p265 = pneg %p167
        $region34: #{tpu_custom_call.1} parent=11 // pred_check_branch
          %267 = sbr.rel (%p265) target = $region36
        $region35: #{tpu_custom_call.1} parent=11 // pred_region
          _
        $region36: #{tpu_custom_call.1} parent=11 // pred_fallthru
          _
        // Predicated region
        $region37: #{tpu_custom_call.1} parent=11 // pred_check
          %p268 = pneg %p188
        $region38: #{tpu_custom_call.1} parent=11 // pred_check_branch
          %270 = sbr.rel (%p268) target = $region40
        $region39: #{tpu_custom_call.1} parent=11 // pred_region
          _
        $region40: #{tpu_custom_call.1} parent=11 // pred_fallthru
          _
        // Predicated region
        $region41: #{tpu_custom_call.1} parent=11 // pred_check
          %p271 = pneg %p209
        $region42: #{tpu_custom_call.1} parent=11 // pred_check_branch
          %273 = sbr.rel (%p271) target = $region44
        $region43: #{tpu_custom_call.1} parent=11 // pred_region
          _
        $region44: #{tpu_custom_call.1} parent=11 // pred_fallthru
          _
      $region12: #{tpu_custom_call.1} parent=5 // pred_fallthru
        _
      %p274 = scmp.lt.s32.totalorder %s15, 2
      // Predicated region
      $region45: #{tpu_custom_call.1} parent=5 // pred_check
        %p275 = pneg %p274
      $region46: #{tpu_custom_call.1} parent=5 // pred_check_branch
        %277 = sbr.rel (%p275) target = $region48
      $region47: #{tpu_custom_call.1} parent=5 // pred_region
        // Predicated region
        $region49: #{tpu_custom_call.1} parent=47 // pred_check
          %p278 = pneg %p35
        $region50: #{tpu_custom_call.1} parent=47 // pred_check_branch
          %280 = sbr.rel (%p278) target = $region52
        $region51: #{tpu_custom_call.1} parent=47 // pred_region
          %s281 = smul.u32 13, %s15
          %s282 = ssub.s32 25, %s281
          %p283 = scmp.lt.s32.totalorder %s282, 13
          %s284 = scalar_select %p283, %s282, 13
          %s285 = smul.u32 8, %s284
          %p286 = scmp.lt.s32.totalorder %s281, 24
          %s287 = scalar_select %p286, %s281, 24
          %s288 = smul.addr %s287, 8
          %s289 = scalar_lea.vmem %s0, %s288
          %s290 = smul.u32 13, %s15
          %s291 = ssub.s32 25, %s290
          %p292 = scmp.lt.s32.totalorder %s291, 13
          %s293 = scalar_select %p292, %s291, 13
          %s294 = smul.u32 8, %s293
        $region52: #{tpu_custom_call.1} parent=47 // pred_fallthru
          _
      $region48: #{tpu_custom_call.1} parent=5 // pred_fallthru
        _
      %p295 = scmp.le.s32.totalorder 1, %s15
      %p296 = scmp.lt.s32.totalorder %s15, 3
      %p297 = pnand %p295, %p296
      %p298 = pneg %p297
      // Predicated region
      $region53: #{tpu_custom_call.1} parent=5 // pred_check
        _
      $region54: #{tpu_custom_call.1} parent=5 // pred_check_branch
        %300 = sbr.rel (%p297) target = $region56
      $region55: #{tpu_custom_call.1} parent=5 // pred_region
        %s301 = ssub.s32 %s15, 1
        %s302 = smul.u32 13, %s20
        %s303 = ssub.s32 25, %s302
        %p304 = scmp.lt.s32.totalorder %s303, 13
        %s305 = scalar_select %p304, %s303, 13
        %s306 = smul.u32 8, %s305
        %p307 = scmp.lt.s32.totalorder %s302, 24
        %s308 = scalar_select %p307, %s302, 24
        %s309 = smul.addr %s308, 8
        %s310 = scalar_lea.vmem %s0, %s309
        %p311 = pneg %p41
        %p312 = pneg %p38
        %p313 = pneg %p62
        %p314 = pneg %p59
        %p315 = pneg %p83
        %p316 = pneg %p80
        %p317 = pneg %p104
        %p318 = pneg %p101
        %p319 = pneg %p125
        %p320 = pneg %p122
        %p321 = pneg %p146
        %p322 = pneg %p143
        %p323 = pneg %p167
        %p324 = pneg %p164
        %p325 = pneg %p188
        %p326 = pneg %p185
        %p327 = pneg %p209
        %p328 = pneg %p206
        %p329 = pneg %p235
        %p330 = pneg %p232
        %s331 = sand.u32 %s222, 1
        %s332 = sand.u32 %s222, 1
        %s333 = smul.addr %s332, 104
        %s334 = scalar_lea.vmem [#allocation2], %s333
        %s335 = smul.u32 13, %s20
        %s336 = ssub.s32 25, %s335
        %p337 = scmp.lt.s32.totalorder %s336, 13
        %s338 = scalar_select %p337, %s336, 13
        %s339 = smul.u32 8, %s338
        %p340 = scmp.lt.s32.totalorder %s335, 24
        %s341 = scalar_select %p340, %s335, 24
        %s342 = smul.addr %s341, 8
        %s343 = scalar_lea.vmem %s0, %s342
        %s344 = smul.u32 13, %s20
        %s345 = ssub.s32 25, %s344
        %p346 = scmp.lt.s32.totalorder %s345, 13
        %s347 = scalar_select %p346, %s345, 13
        %s348 = smul.u32 8, %s347
        %s349 = smul.u32 13, %s20
        %s350 = ssub.s32 25, %s349
        %p351 = scmp.lt.s32.totalorder %s350, 13
        %s352 = scalar_select %p351, %s350, 13
        %s353 = smul.u32 8, %s352
        %v354 = vld [vmem:[%s343] sm:$0xff]
        %v355 = vld [vmem:[%s343 + $0x8] sm:$0xff]
        %v356 = vld [vmem:[%s343 + $0x10] sm:$0xff]
        %v357 = vld [vmem:[%s343 + $0x18] sm:$0xff]
        %v358 = vld [vmem:[%s343 + $0x20] sm:$0xff]
        %v359 = vld [vmem:[%s343 + $0x28] sm:$0xff]
        %v360 = vld [vmem:[%s343 + $0x30] sm:$0xff]
        %v361 = vld [vmem:[%s343 + $0x38] sm:$0xff]
        %v362 = vld [vmem:[%s343 + $0x40] sm:$0xff]
        %v363 = vld [vmem:[%s343 + $0x48] sm:$0xff]
        %v364 = vld [vmem:[%s343 + $0x50] sm:$0xff]
        %v365 = vld [vmem:[%s343 + $0x58] sm:$0xff]
        %v366 = vld [vmem:[%s343 + $0x60] sm:$0xff]
        %v367 = vld [vmem:[%s1] sm:$0xff]
        %v368 = vld [vmem:[%s1 + $0x8] sm:$0xff]
        %v369 = vld [vmem:[%s1 + $0x10] sm:$0xff]
        %v370 = vld [vmem:[%s1 + $0x18] sm:$0xff]
        %v371 = vld [vmem:[%s2] sm:$0x1]
        %v373 = vperm.slane %v371, 0
        %vm375 = vcmask 261120
        %v377 = vsel %vm375, %v354, 0
        %v380 = vsel %vm375, %v355, 0
        %v383 = vsel %vm375, %v356, 0
        %v386 = vsel %vm375, %v357, 0
        %v389 = vsel %vm375, %v358, 0
        %v392 = vsel %vm375, %v359, 0
        %v395 = vsel %vm375, %v360, 0
        %v398 = vsel %vm375, %v361, 0
        %v401 = vsel %vm375, %v362, 0
        %v404 = vsel %vm375, %v363, 0
        %v407 = vsel %vm375, %v364, 0
        %v410 = vsel %vm375, %v365, 0
        %v413 = vsel %vm375, %v366, 0
        %415 = vmatpush.msra.mxu0 0.0
        %416 = vmatpush.msra.mxu0 0.0
        %417 = vmatpush.msra.mxu0 0.0
        %418 = vmatpush.msra.mxu0 0.0
        %419 = vmatpush.msra.mxu0 0.0
        %420 = vmatpush.msra.mxu0 0.0
        %421 = vmatpush.msra.mxu0 0.0
        %422 = vmatpush.msra.mxu0 0.0
        %423 = vmatpush.msra.mxu0 0.0
        %424 = vmatpush.msra.mxu0 0.0
        %425 = vmatpush.msra.mxu0 0.0
        %426 = vmatpush.msra.mxu0 0.0
        %427 = vmatpush.msra.mxu0 %v370
        %428 = vmatpush.msra.mxu0 %v369
        %429 = vmatpush.msra.mxu0 %v368
        %430 = vmatpush.msra.mxu0 %v367
        %431 = vmatmul.f32.gmra.mxu0 %v377
        %v432 = vpop.f32.mrf.mxu0
        %v433 = vadd.f32 %v373, %v432
        %434 = vmatmul.f32.gmra.mxu0 %v380
        %v435 = vpop.f32.mrf.mxu0
        %v436 = vadd.f32 %v373, %v435
        %437 = vmatmul.f32.gmra.mxu0 %v383
        %v438 = vpop.f32.mrf.mxu0
        %v439 = vadd.f32 %v373, %v438
        %440 = vmatmul.f32.gmra.mxu0 %v386
        %v441 = vpop.f32.mrf.mxu0
        %v442 = vadd.f32 %v373, %v441
        %443 = vmatmul.f32.gmra.mxu0 %v389
        %v444 = vpop.f32.mrf.mxu0
        %v445 = vadd.f32 %v373, %v444
        %446 = vmatmul.f32.gmra.mxu0 %v392
        %v447 = vpop.f32.mrf.mxu0
        %v448 = vadd.f32 %v373, %v447
        %449 = vmatmul.f32.gmra.mxu0 %v395
        %v450 = vpop.f32.mrf.mxu0
        %v451 = vadd.f32 %v373, %v450
        %452 = vmatmul.f32.gmra.mxu0 %v398
        %v453 = vpop.f32.mrf.mxu0
        %v454 = vadd.f32 %v373, %v453
        %455 = vmatmul.f32.gmra.mxu0 %v401
        %v456 = vpop.f32.mrf.mxu0
        %v457 = vadd.f32 %v373, %v456
        %458 = vmatmul.f32.gmra.mxu0 %v404
        %v459 = vpop.f32.mrf.mxu0
        %v460 = vadd.f32 %v373, %v459
        %461 = vmatmul.f32.gmra.mxu0 %v407
        %v462 = vpop.f32.mrf.mxu0
        %v463 = vadd.f32 %v373, %v462
        %464 = vmatmul.f32.gmra.mxu0 %v410
        %v465 = vpop.f32.mrf.mxu0
        %v466 = vadd.f32 %v373, %v465
        %467 = vmatmul.f32.gmra.mxu0 %v413
        %v468 = vpop.f32.mrf.mxu0
        %v469 = vadd.f32 %v373, %v468
        %470 = vdwg.mxu0
        %v471 = vmax.f32 %v433, 0.0
        %v472 = vmax.f32 %v436, 0.0
        %v473 = vmax.f32 %v439, 0.0
        %v474 = vmax.f32 %v442, 0.0
        %v475 = vmax.f32 %v445, 0.0
        %v476 = vmax.f32 %v448, 0.0
        %v477 = vmax.f32 %v451, 0.0
        %v478 = vmax.f32 %v454, 0.0
        %v479 = vmax.f32 %v457, 0.0
        %v480 = vmax.f32 %v460, 0.0
        %v481 = vmax.f32 %v463, 0.0
        %v482 = vmax.f32 %v466, 0.0
        %v483 = vmax.f32 %v469, 0.0
        %v484 = vld [vmem:[%s3] sm:$0xff]
        %v485 = vld [vmem:[%s3 + $0x8] sm:$0xff]
        %v486 = vld [vmem:[%s3 + $0x10] sm:$0xff]
        %v487 = vld [vmem:[%s3 + $0x18] sm:$0xff]
        %v488 = vld [vmem:[%s3 + $0x20] sm:$0xff]
        %v489 = vld [vmem:[%s3 + $0x28] sm:$0xff]
        %v490 = vld [vmem:[%s3 + $0x30] sm:$0xff]
        %v491 = vld [vmem:[%s3 + $0x38] sm:$0xff]
        %v492 = vld [vmem:[%s3 + $0x40] sm:$0xff]
        %v493 = vld [vmem:[%s3 + $0x48] sm:$0xff]
        %v494 = vld [vmem:[%s3 + $0x50] sm:$0xff]
        %v495 = vld [vmem:[%s3 + $0x58] sm:$0xff]
        %v496 = vld [vmem:[%s3 + $0x60] sm:$0xff]
        %v497 = vld [vmem:[%s3 + $0x68] sm:$0xff]
        %v498 = vld [vmem:[%s3 + $0x70] sm:$0xff]
        %v499 = vld [vmem:[%s3 + $0x78] sm:$0xff]
        %v500 = vld [vmem:[%s4] sm:$0x1]
        %v502 = vperm.slane %v500, 0
        %504 = vmatpush.msra.mxu0 %v499
        %505 = vmatpush.msra.mxu0 %v498
        %506 = vmatpush.msra.mxu0 %v497
        %507 = vmatpush.msra.mxu0 %v496
        %508 = vmatpush.msra.mxu0 %v495
        %509 = vmatpush.msra.mxu0 %v494
        %510 = vmatpush.msra.mxu0 %v493
        %511 = vmatpush.msra.mxu0 %v492
        %512 = vmatpush.msra.mxu0 %v491
        %513 = vmatpush.msra.mxu0 %v490
        %514 = vmatpush.msra.mxu0 %v489
        %515 = vmatpush.msra.mxu0 %v488
        %516 = vmatpush.msra.mxu0 %v487
        %517 = vmatpush.msra.mxu0 %v486
        %518 = vmatpush.msra.mxu0 %v485
        %519 = vmatpush.msra.mxu0 %v484
        %520 = vmatmul.f32.gmra.mxu0 %v471
        %v521 = vpop.f32.mrf.mxu0
        %v522 = vadd.f32 %v502, %v521
        %523 = vmatmul.f32.gmra.mxu0 %v472
        %v524 = vpop.f32.mrf.mxu0
        %v525 = vadd.f32 %v502, %v524
        %526 = vmatmul.f32.gmra.mxu0 %v473
        %v527 = vpop.f32.mrf.mxu0
        %v528 = vadd.f32 %v502, %v527
        %529 = vmatmul.f32.gmra.mxu0 %v474
        %v530 = vpop.f32.mrf.mxu0
        %v531 = vadd.f32 %v502, %v530
        %532 = vmatmul.f32.gmra.mxu0 %v475
        %v533 = vpop.f32.mrf.mxu0
        %v534 = vadd.f32 %v502, %v533
        %535 = vmatmul.f32.gmra.mxu0 %v476
        %v536 = vpop.f32.mrf.mxu0
        %v537 = vadd.f32 %v502, %v536
        %538 = vmatmul.f32.gmra.mxu0 %v477
        %v539 = vpop.f32.mrf.mxu0
        %v540 = vadd.f32 %v502, %v539
        %541 = vmatmul.f32.gmra.mxu0 %v478
        %v542 = vpop.f32.mrf.mxu0
        %v543 = vadd.f32 %v502, %v542
        %544 = vmatmul.f32.gmra.mxu0 %v479
        %v545 = vpop.f32.mrf.mxu0
        %v546 = vadd.f32 %v502, %v545
        %547 = vmatmul.f32.gmra.mxu0 %v480
        %v548 = vpop.f32.mrf.mxu0
        %v549 = vadd.f32 %v502, %v548
        %550 = vmatmul.f32.gmra.mxu0 %v481
        %v551 = vpop.f32.mrf.mxu0
        %v552 = vadd.f32 %v502, %v551
        %553 = vmatmul.f32.gmra.mxu0 %v482
        %v554 = vpop.f32.mrf.mxu0
        %v555 = vadd.f32 %v502, %v554
        %556 = vmatmul.f32.gmra.mxu0 %v483
        %v557 = vpop.f32.mrf.mxu0
        %v558 = vadd.f32 %v502, %v557
        %559 = vdwg.mxu0
        %v560 = vmax.f32 %v522, 0.0
        %v561 = vmax.f32 %v525, 0.0
        %v562 = vmax.f32 %v528, 0.0
        %v563 = vmax.f32 %v531, 0.0
        %v564 = vmax.f32 %v534, 0.0
        %v565 = vmax.f32 %v537, 0.0
        %v566 = vmax.f32 %v540, 0.0
        %v567 = vmax.f32 %v543, 0.0
        %v568 = vmax.f32 %v546, 0.0
        %v569 = vmax.f32 %v549, 0.0
        %v570 = vmax.f32 %v552, 0.0
        %v571 = vmax.f32 %v555, 0.0
        %v572 = vmax.f32 %v558, 0.0
        %v573 = vld [vmem:[%s5] sm:$0xff]
        %v574 = vld [vmem:[%s5 + $0x8] sm:$0xff]
        %v575 = vld [vmem:[%s5 + $0x10] sm:$0xff]
        %v576 = vld [vmem:[%s5 + $0x18] sm:$0xff]
        %v577 = vld [vmem:[%s5 + $0x20] sm:$0xff]
        %v578 = vld [vmem:[%s5 + $0x28] sm:$0xff]
        %v579 = vld [vmem:[%s5 + $0x30] sm:$0xff]
        %v580 = vld [vmem:[%s5 + $0x38] sm:$0xff]
        %v581 = vld [vmem:[%s5 + $0x40] sm:$0xff]
        %v582 = vld [vmem:[%s5 + $0x48] sm:$0xff]
        %v583 = vld [vmem:[%s5 + $0x50] sm:$0xff]
        %v584 = vld [vmem:[%s5 + $0x58] sm:$0xff]
        %v585 = vld [vmem:[%s5 + $0x60] sm:$0xff]
        %v586 = vld [vmem:[%s5 + $0x68] sm:$0xff]
        %v587 = vld [vmem:[%s5 + $0x70] sm:$0xff]
        %v588 = vld [vmem:[%s5 + $0x78] sm:$0xff]
        %v589 = vld [vmem:[%s6] sm:$0x1]
        %v591 = vperm.slane %v589, 0
        %593 = vmatpush.msra.mxu0 %v588
        %594 = vmatpush.msra.mxu0 %v587
        %595 = vmatpush.msra.mxu0 %v586
        %596 = vmatpush.msra.mxu0 %v585
        %597 = vmatpush.msra.mxu0 %v584
        %598 = vmatpush.msra.mxu0 %v583
        %599 = vmatpush.msra.mxu0 %v582
        %600 = vmatpush.msra.mxu0 %v581
        %601 = vmatpush.msra.mxu0 %v580
        %602 = vmatpush.msra.mxu0 %v579
        %603 = vmatpush.msra.mxu0 %v578
        %604 = vmatpush.msra.mxu0 %v577
        %605 = vmatpush.msra.mxu0 %v576
        %606 = vmatpush.msra.mxu0 %v575
        %607 = vmatpush.msra.mxu0 %v574
        %608 = vmatpush.msra.mxu0 %v573
        %609 = vmatmul.f32.gmra.mxu0 %v560
        %v610 = vpop.f32.mrf.mxu0
        %v611 = vadd.f32 %v591, %v610
        %612 = vmatmul.f32.gmra.mxu0 %v561
        %v613 = vpop.f32.mrf.mxu0
        %v614 = vadd.f32 %v591, %v613
        %615 = vmatmul.f32.gmra.mxu0 %v562
        %v616 = vpop.f32.mrf.mxu0
        %v617 = vadd.f32 %v591, %v616
        %618 = vmatmul.f32.gmra.mxu0 %v563
        %v619 = vpop.f32.mrf.mxu0
        %v620 = vadd.f32 %v591, %v619
        %621 = vmatmul.f32.gmra.mxu0 %v564
        %v622 = vpop.f32.mrf.mxu0
        %v623 = vadd.f32 %v591, %v622
        %624 = vmatmul.f32.gmra.mxu0 %v565
        %v625 = vpop.f32.mrf.mxu0
        %v626 = vadd.f32 %v591, %v625
        %627 = vmatmul.f32.gmra.mxu0 %v566
        %v628 = vpop.f32.mrf.mxu0
        %v629 = vadd.f32 %v591, %v628
        %630 = vmatmul.f32.gmra.mxu0 %v567
        %v631 = vpop.f32.mrf.mxu0
        %v632 = vadd.f32 %v591, %v631
        %633 = vmatmul.f32.gmra.mxu0 %v568
        %v634 = vpop.f32.mrf.mxu0
        %v635 = vadd.f32 %v591, %v634
        %636 = vmatmul.f32.gmra.mxu0 %v569
        %v637 = vpop.f32.mrf.mxu0
        %v638 = vadd.f32 %v591, %v637
        %639 = vmatmul.f32.gmra.mxu0 %v570
        %v640 = vpop.f32.mrf.mxu0
        %v641 = vadd.f32 %v591, %v640
        %642 = vmatmul.f32.gmra.mxu0 %v571
        %v643 = vpop.f32.mrf.mxu0
        %v644 = vadd.f32 %v591, %v643
        %645 = vmatmul.f32.gmra.mxu0 %v572
        %v646 = vpop.f32.mrf.mxu0
        %v647 = vadd.f32 %v591, %v646
        %648 = vdwg.mxu0
        %v649 = vld [vmem:[%s7] sm:$0xff]
        %v650 = vld [vmem:[%s7 + $0x8] sm:$0xff]
        %v651 = vld [vmem:[%s7 + $0x10] sm:$0xff]
        %v652 = vld [vmem:[%s7 + $0x18] sm:$0xff]
        %v653 = vld [vmem:[%s7 + $0x20] sm:$0xff]
        %v654 = vld [vmem:[%s7 + $0x28] sm:$0xff]
        %v655 = vld [vmem:[%s7 + $0x30] sm:$0xff]
        %v656 = vld [vmem:[%s7 + $0x38] sm:$0xff]
        %v657 = vld [vmem:[%s7 + $0x40] sm:$0xff]
        %v658 = vld [vmem:[%s7 + $0x48] sm:$0xff]
        %v659 = vld [vmem:[%s7 + $0x50] sm:$0xff]
        %v660 = vld [vmem:[%s7 + $0x58] sm:$0xff]
        %v661 = vld [vmem:[%s7 + $0x60] sm:$0xff]
        %v662 = vld [vmem:[%s7 + $0x68] sm:$0xff]
        %v663 = vld [vmem:[%s7 + $0x70] sm:$0xff]
        %v664 = vld [vmem:[%s7 + $0x78] sm:$0xff]
        %v665 = vld [vmem:[%s8] sm:$0x1]
        %v667 = vperm.slane %v665, 0
        %669 = vmatpush.msra.mxu0 %v664
        %670 = vmatpush.msra.mxu0 %v663
        %671 = vmatpush.msra.mxu0 %v662
        %672 = vmatpush.msra.mxu0 %v661
        %673 = vmatpush.msra.mxu0 %v660
        %674 = vmatpush.msra.mxu0 %v659
        %675 = vmatpush.msra.mxu0 %v658
        %676 = vmatpush.msra.mxu0 %v657
        %677 = vmatpush.msra.mxu0 %v656
        %678 = vmatpush.msra.mxu0 %v655
        %679 = vmatpush.msra.mxu0 %v654
        %680 = vmatpush.msra.mxu0 %v653
        %681 = vmatpush.msra.mxu0 %v652
        %682 = vmatpush.msra.mxu0 %v651
        %683 = vmatpush.msra.mxu0 %v650
        %684 = vmatpush.msra.mxu0 %v649
        %685 = vmatmul.f32.gmra.mxu0 %v611
        %v686 = vpop.f32.mrf.mxu0
        %v687 = vadd.f32 %v667, %v686
        %688 = vmatmul.f32.gmra.mxu0 %v614
        %v689 = vpop.f32.mrf.mxu0
        %v690 = vadd.f32 %v667, %v689
        %691 = vmatmul.f32.gmra.mxu0 %v617
        %v692 = vpop.f32.mrf.mxu0
        %v693 = vadd.f32 %v667, %v692
        %694 = vmatmul.f32.gmra.mxu0 %v620
        %v695 = vpop.f32.mrf.mxu0
        %v696 = vadd.f32 %v667, %v695
        %697 = vmatmul.f32.gmra.mxu0 %v623
        %v698 = vpop.f32.mrf.mxu0
        %v699 = vadd.f32 %v667, %v698
        %700 = vmatmul.f32.gmra.mxu0 %v626
        %v701 = vpop.f32.mrf.mxu0
        %v702 = vadd.f32 %v667, %v701
        %703 = vmatmul.f32.gmra.mxu0 %v629
        %v704 = vpop.f32.mrf.mxu0
        %v705 = vadd.f32 %v667, %v704
        %706 = vmatmul.f32.gmra.mxu0 %v632
        %v707 = vpop.f32.mrf.mxu0
        %v708 = vadd.f32 %v667, %v707
        %709 = vmatmul.f32.gmra.mxu0 %v635
        %v710 = vpop.f32.mrf.mxu0
        %v711 = vadd.f32 %v667, %v710
        %712 = vmatmul.f32.gmra.mxu0 %v638
        %v713 = vpop.f32.mrf.mxu0
        %v714 = vadd.f32 %v667, %v713
        %715 = vmatmul.f32.gmra.mxu0 %v641
        %v716 = vpop.f32.mrf.mxu0
        %v717 = vadd.f32 %v667, %v716
        %718 = vmatmul.f32.gmra.mxu0 %v644
        %v719 = vpop.f32.mrf.mxu0
        %v720 = vadd.f32 %v667, %v719
        %721 = vmatmul.f32.gmra.mxu0 %v647
        %v722 = vpop.f32.mrf.mxu0
        %v723 = vadd.f32 %v667, %v722
        %724 = vdwg.mxu0
        %vm725 = vcmask 130048
        %726 = vst.msk [vmem:[%s334] sm:$0xff] %vm725, %v687
        %727 = vst.msk [vmem:[%s334 + $0x8] sm:$0xff] %vm725, %v690
        %728 = vst.msk [vmem:[%s334 + $0x10] sm:$0xff] %vm725, %v693
        %729 = vst.msk [vmem:[%s334 + $0x18] sm:$0xff] %vm725, %v696
        %730 = vst.msk [vmem:[%s334 + $0x20] sm:$0xff] %vm725, %v699
        %731 = vst.msk [vmem:[%s334 + $0x28] sm:$0xff] %vm725, %v702
        %732 = vst.msk [vmem:[%s334 + $0x30] sm:$0xff] %vm725, %v705
        %733 = vst.msk [vmem:[%s334 + $0x38] sm:$0xff] %vm725, %v708
        %734 = vst.msk [vmem:[%s334 + $0x40] sm:$0xff] %vm725, %v711
        %735 = vst.msk [vmem:[%s334 + $0x48] sm:$0xff] %vm725, %v714
        %736 = vst.msk [vmem:[%s334 + $0x50] sm:$0xff] %vm725, %v717
        %737 = vst.msk [vmem:[%s334 + $0x58] sm:$0xff] %vm725, %v720
        %738 = vst.msk [vmem:[%s334 + $0x60] sm:$0xff] %vm725, %v723
        %s739 = sand.u32 %s222, 1
        %s740 = sand.u32 %s222, 1
        %s741 = smul.addr %s740, 104
        %s742 = scalar_lea.vmem [#allocation2], %s741
        // Predicated region
        $region57: #{tpu_custom_call.1} parent=55 // pred_check
          %p743 = pneg %p232
        $region58: #{tpu_custom_call.1} parent=55 // pred_check_branch
          %745 = sbr.rel (%p743) target = $region60
        $region59: #{tpu_custom_call.1} parent=55 // pred_region
          %s746 = smul.u32 13, %s20
          %s747 = ssub.s32 25, %s746
          %p748 = scmp.lt.s32.totalorder %s747, 13
          %s749 = scalar_select %p748, %s747, 13
          %s750 = smul.u32 8, %s749
          %p751 = scmp.ne.s32.totalorder 0, %s750
          %s752 = smul.addr %s746, 8
          %s753 = scalar_lea.vmem %s9, %s752
          // Predicated region
          $region61: #{tpu_custom_call.1} parent=59 // pred_check
            %p754 = pneg %p751
          $region62: #{tpu_custom_call.1} parent=59 // pred_check_branch
            %756 = sbr.rel (%p754) target = $region64
          $region63: #{tpu_custom_call.1} parent=59 // pred_region
            // Predicated region
            $region65: #{tpu_custom_call.1} parent=63 // pred_check
              _
            $region66: #{tpu_custom_call.1} parent=63 // pred_check_branch
              %758 = sbr.rel (0) target = $region68
            $region67: #{tpu_custom_call.1} parent=63 // pred_region
              // Predicated region
              $region87: #{tpu_custom_call.1} parent=67 // pred_check
                _
              $region88: #{tpu_custom_call.1} parent=67 // pred_check_branch
                %833 = sbr.rel (0) target = $region90
              $region89: #{tpu_custom_call.1} parent=67 // pred_region
                %s834 = sdiv.u32.pop %s749, 13
                %s835 = srem.u32.pop %s749, 13
                // While loop
                $region91: #{tpu_custom_call.1} parent=89 // loop_pre_header
                  _
                $region92: #{tpu_custom_call.1} parent=89 // loop_header
                  %s837 = sphi 0, %s839
                  %p838 = scmp.ge.s32.totalorder %s837, %s834
                  %s842 = sphi 0, %s873
                  %s843 = sphi %s742, %s876
                  %s844 = sphi %s753, %s877
                $region93: #{tpu_custom_call.1} parent=89 // loop_header_branch
                  %841 = sbr.rel (%p838) target = $region97
                $region94: #{tpu_custom_call.1} parent=89 // loop_body
                  %v845 = vld [vmem:[%s843] sm:$0xff]
                  %846 = vst [vmem:[%s844] sm:$0xff] %v845
                  %v847 = vld [vmem:[%s843 + $0x8] sm:$0xff]
                  %848 = vst [vmem:[%s844 + $0x8] sm:$0xff] %v847
                  %v849 = vld [vmem:[%s843 + $0x10] sm:$0xff]
                  %850 = vst [vmem:[%s844 + $0x10] sm:$0xff] %v849
                  %v851 = vld [vmem:[%s843 + $0x18] sm:$0xff]
                  %852 = vst [vmem:[%s844 + $0x18] sm:$0xff] %v851
                  %v853 = vld [vmem:[%s843 + $0x20] sm:$0xff]
                  %854 = vst [vmem:[%s844 + $0x20] sm:$0xff] %v853
                  %v855 = vld [vmem:[%s843 + $0x28] sm:$0xff]
                  %856 = vst [vmem:[%s844 + $0x28] sm:$0xff] %v855
                  %v857 = vld [vmem:[%s843 + $0x30] sm:$0xff]
                  %858 = vst [vmem:[%s844 + $0x30] sm:$0xff] %v857
                  %v859 = vld [vmem:[%s843 + $0x38] sm:$0xff]
                  %860 = vst [vmem:[%s844 + $0x38] sm:$0xff] %v859
                  %v861 = vld [vmem:[%s843 + $0x40] sm:$0xff]
                  %862 = vst [vmem:[%s844 + $0x40] sm:$0xff] %v861
                  %v863 = vld [vmem:[%s843 + $0x48] sm:$0xff]
                  %864 = vst [vmem:[%s844 + $0x48] sm:$0xff] %v863
                  %v865 = vld [vmem:[%s843 + $0x50] sm:$0xff]
                  %866 = vst [vmem:[%s844 + $0x50] sm:$0xff] %v865
                  %v867 = vld [vmem:[%s843 + $0x58] sm:$0xff]
                  %868 = vst [vmem:[%s844 + $0x58] sm:$0xff] %v867
                  %v869 = vld [vmem:[%s843 + $0x60] sm:$0xff]
                  %870 = vst [vmem:[%s844 + $0x60] sm:$0xff] %v869
                  %s871 = sadd.s32 1, %s842
                  %p872 = scmp.ge.s32.totalorder %s871, %s834
                  %s873 = scalar_select %p872, 0, %s871
                  %s874 = smul.u32 %s873, 104
                  %s875 = smul.u32 %s873, 104
                  %s876 = scalar_lea.vmem %s742, %s874 [#allocation2]
                  %s877 = scalar_lea.vmem %s753, %s875
                $region95: #{tpu_custom_call.1} parent=89 // loop_footer
                  %s839 = sadd.s32 %s837, 1
                $region96: #{tpu_custom_call.1} parent=89 // loop_footer_branch
                  %836 = sbr.rel target = $region92
                $region97: #{tpu_custom_call.1} parent=89 // loop_exit
                  _
                %s878 = sdiv.u32.pop %s749, 13
                %s879 = srem.u32.pop %s749, 13
                %s880 = smul.u32 %s878, 13
                %s881 = smul.u32 8, %s880
                %s882 = scalar_lea.vmem %s742, %s881 [#allocation2]
                %s883 = smul.u32 8, %s880
                %s884 = scalar_lea.vmem %s753, %s883
                // While loop
                $region98: #{tpu_custom_call.1} parent=89 // loop_pre_header
                  _
                $region99: #{tpu_custom_call.1} parent=89 // loop_header
                  %s886 = sphi 0, %s888
                  %p887 = scmp.ge.s32.totalorder %s886, %s879
                  %s891 = sphi 0, %s898
                  %s892 = sphi %s882, %s901
                  %s893 = sphi %s884, %s902
                $region100: #{tpu_custom_call.1} parent=89 // loop_header_branch
                  %890 = sbr.rel (%p887) target = $region104
                $region101: #{tpu_custom_call.1} parent=89 // loop_body
                  %v894 = vld [vmem:[%s892] sm:$0xff]
                  %895 = vst [vmem:[%s893] sm:$0xff] %v894
                  %s896 = sadd.s32 1, %s891
                  %p897 = scmp.ge.s32.totalorder %s896, %s879
                  %s898 = scalar_select %p897, 0, %s896
                  %s899 = smul.u32 %s898, 8
                  %s900 = smul.u32 %s898, 8
                  %s901 = scalar_lea.vmem %s882, %s899 [#allocation2]
                  %s902 = scalar_lea.vmem %s884, %s900
                $region102: #{tpu_custom_call.1} parent=89 // loop_footer
                  %s888 = sadd.s32 %s886, 1
                $region103: #{tpu_custom_call.1} parent=89 // loop_footer_branch
                  %885 = sbr.rel target = $region99
                $region104: #{tpu_custom_call.1} parent=89 // loop_exit
                  _
              $region90: #{tpu_custom_call.1} parent=67 // pred_fallthru
                _
              // Predicated region
              $region105: #{tpu_custom_call.1} parent=67 // pred_check
                _
              $region106: #{tpu_custom_call.1} parent=67 // pred_check_branch
                %904 = sbr.rel target = $region108
              $region107: #{tpu_custom_call.1} parent=67 // pred_region
                _
              $region108: #{tpu_custom_call.1} parent=67 // pred_fallthru
                _
            $region68: #{tpu_custom_call.1} parent=63 // pred_fallthru
              _
            // Predicated region
            $region69: #{tpu_custom_call.1} parent=63 // pred_check
              _
            $region70: #{tpu_custom_call.1} parent=63 // pred_check_branch
              %760 = sbr.rel target = $region72
            $region71: #{tpu_custom_call.1} parent=63 // pred_region
              %s762 = ssub.s32 256, 1
              %s763 = sdiv.u32.pop %s749, 13
              %s764 = srem.u32.pop %s749, 13
              // While loop
              $region73: #{tpu_custom_call.1} parent=71 // loop_pre_header
                _
              $region74: #{tpu_custom_call.1} parent=71 // loop_header
                %s766 = sphi 0, %s768
                %p767 = scmp.ge.s32.totalorder %s766, %s763
                %s771 = sphi 0, %s802
                %s772 = sphi %s742, %s805
                %s773 = sphi %s753, %s806
              $region75: #{tpu_custom_call.1} parent=71 // loop_header_branch
                %770 = sbr.rel (%p767) target = $region79
              $region76: #{tpu_custom_call.1} parent=71 // loop_body
                %v774 = vld [vmem:[%s772] sm:%s762]
                %775 = vst [vmem:[%s773] sm:%s762] %v774
                %v776 = vld [vmem:[%s772 + $0x8] sm:%s762]
                %777 = vst [vmem:[%s773 + $0x8] sm:%s762] %v776
                %v778 = vld [vmem:[%s772 + $0x10] sm:%s762]
                %779 = vst [vmem:[%s773 + $0x10] sm:%s762] %v778
                %v780 = vld [vmem:[%s772 + $0x18] sm:%s762]
                %781 = vst [vmem:[%s773 + $0x18] sm:%s762] %v780
                %v782 = vld [vmem:[%s772 + $0x20] sm:%s762]
                %783 = vst [vmem:[%s773 + $0x20] sm:%s762] %v782
                %v784 = vld [vmem:[%s772 + $0x28] sm:%s762]
                %785 = vst [vmem:[%s773 + $0x28] sm:%s762] %v784
                %v786 = vld [vmem:[%s772 + $0x30] sm:%s762]
                %787 = vst [vmem:[%s773 + $0x30] sm:%s762] %v786
                %v788 = vld [vmem:[%s772 + $0x38] sm:%s762]
                %789 = vst [vmem:[%s773 + $0x38] sm:%s762] %v788
                %v790 = vld [vmem:[%s772 + $0x40] sm:%s762]
                %791 = vst [vmem:[%s773 + $0x40] sm:%s762] %v790
                %v792 = vld [vmem:[%s772 + $0x48] sm:%s762]
                %793 = vst [vmem:[%s773 + $0x48] sm:%s762] %v792
                %v794 = vld [vmem:[%s772 + $0x50] sm:%s762]
                %795 = vst [vmem:[%s773 + $0x50] sm:%s762] %v794
                %v796 = vld [vmem:[%s772 + $0x58] sm:%s762]
                %797 = vst [vmem:[%s773 + $0x58] sm:%s762] %v796
                %v798 = vld [vmem:[%s772 + $0x60] sm:%s762]
                %799 = vst [vmem:[%s773 + $0x60] sm:%s762] %v798
                %s800 = sadd.s32 1, %s771
                %p801 = scmp.ge.s32.totalorder %s800, %s763
                %s802 = scalar_select %p801, 0, %s800
                %s803 = smul.u32 %s802, 104
                %s804 = smul.u32 %s802, 104
                %s805 = scalar_lea.vmem %s742, %s803 [#allocation2]
                %s806 = scalar_lea.vmem %s753, %s804
              $region77: #{tpu_custom_call.1} parent=71 // loop_footer
                %s768 = sadd.s32 %s766, 1
              $region78: #{tpu_custom_call.1} parent=71 // loop_footer_branch
                %765 = sbr.rel target = $region74
              $region79: #{tpu_custom_call.1} parent=71 // loop_exit
                _
              %s807 = sdiv.u32.pop %s749, 13
              %s808 = srem.u32.pop %s749, 13
              %s809 = smul.u32 %s807, 13
              %s810 = smul.u32 8, %s809
              %s811 = scalar_lea.vmem %s742, %s810 [#allocation2]
              %s812 = smul.u32 8, %s809
              %s813 = scalar_lea.vmem %s753, %s812
              // While loop
              $region80: #{tpu_custom_call.1} parent=71 // loop_pre_header
                _
              $region81: #{tpu_custom_call.1} parent=71 // loop_header
                %s815 = sphi 0, %s817
                %p816 = scmp.ge.s32.totalorder %s815, %s808
                %s820 = sphi 0, %s827
                %s821 = sphi %s811, %s830
                %s822 = sphi %s813, %s831
              $region82: #{tpu_custom_call.1} parent=71 // loop_header_branch
                %819 = sbr.rel (%p816) target = $region86
              $region83: #{tpu_custom_call.1} parent=71 // loop_body
                %v823 = vld [vmem:[%s821] sm:%s762]
                %824 = vst [vmem:[%s822] sm:%s762] %v823
                %s825 = sadd.s32 1, %s820
                %p826 = scmp.ge.s32.totalorder %s825, %s808
                %s827 = scalar_select %p826, 0, %s825
                %s828 = smul.u32 %s827, 8
                %s829 = smul.u32 %s827, 8
                %s830 = scalar_lea.vmem %s811, %s828 [#allocation2]
                %s831 = scalar_lea.vmem %s813, %s829
              $region84: #{tpu_custom_call.1} parent=71 // loop_footer
                %s817 = sadd.s32 %s815, 1
              $region85: #{tpu_custom_call.1} parent=71 // loop_footer_branch
                %814 = sbr.rel target = $region81
              $region86: #{tpu_custom_call.1} parent=71 // loop_exit
                _
            $region72: #{tpu_custom_call.1} parent=63 // pred_fallthru
              _
          $region64: #{tpu_custom_call.1} parent=59 // pred_fallthru
            _
          %905 = vnop
        $region60: #{tpu_custom_call.1} parent=55 // pred_fallthru
          _
      $region56: #{tpu_custom_call.1} parent=5 // pred_fallthru
        _
      %p906 = scmp.le.s32.totalorder 2, %s15
      // Predicated region
      $region109: #{tpu_custom_call.1} parent=5 // pred_check
        %p907 = pneg %p906
      $region110: #{tpu_custom_call.1} parent=5 // pred_check_branch
        %909 = sbr.rel (%p907) target = $region112
      $region111: #{tpu_custom_call.1} parent=5 // pred_region
        %s910 = ssub.s32 %s15, 2
        // Predicated region
        $region113: #{tpu_custom_call.1} parent=111 // pred_check
          %p911 = pneg %p238
        $region114: #{tpu_custom_call.1} parent=111 // pred_check_branch
          %913 = sbr.rel (%p911) target = $region116
        $region115: #{tpu_custom_call.1} parent=111 // pred_region
          %s914 = sand.u32 %s223, 1
          %s915 = sand.u32 %s223, 1
          %s916 = smul.addr %s915, 104
          %s917 = scalar_lea.vmem [#allocation2], %s916
        $region116: #{tpu_custom_call.1} parent=111 // pred_fallthru
          _
      $region112: #{tpu_custom_call.1} parent=5 // pred_fallthru
        _
    $region6: #{tpu_custom_call.1} parent=1 // loop_footer
      %s19 = sadd.s32 1, %s15
    $region7: #{tpu_custom_call.1} parent=1 // loop_footer_branch
      %14 = sbr.rel target = $region3
    $region8: #{tpu_custom_call.1} parent=1 // loop_exit
      _

</llo_original>
